<compile_context>
chip_gen: v7x
topology: tpu7x:2x2x1
jax: 0.10.0
libtpu: 0.0.40
codegen_flags: <defaults>
</compile_context>

<pallas_src>
import jax
import jax.numpy as jnp
from jax import lax
from jax.experimental import pallas as pl
from jax.experimental.pallas import tpu as pltpu


def _round_up(x, m):
    return ((x + m - 1) // m) * m


def _pairwise_kernel(prot_ref, comp_ref, pkeep_ref, ckeep_ref,
                     wp_ref, bp_ref, wc_ref, bc_ref, out_ref, protf_ref):
    # prot_f is only a function of the batch tile -> compute once per batch tile
    # (Lc grid axis is inner / "arbitrary", so program_id(1)==0 comes first).
    @pl.when(pl.program_id(1) == 0)
    def _():
        TB, Lp, D = prot_ref.shape
        prot_flat = prot_ref[...].reshape(TB * Lp, D)
        pf = jnp.maximum(
            jnp.dot(prot_flat, wp_ref[...], preferred_element_type=jnp.float32)
            + bp_ref[...], 0.0)
        protf_ref[...] = pf.reshape(TB, Lp, D).astype(protf_ref.dtype)

    TB, TC, D = comp_ref.shape
    comp_flat = comp_ref[...].reshape(TB * TC, D)
    cf = jnp.maximum(
        jnp.dot(comp_flat, wc_ref[...], preferred_element_type=jnp.float32)
        + bc_ref[...], 0.0)
    # Cast back to the (MXU-native) input dtype for the dominant pairwise matmul;
    # accumulation stays f32 via preferred_element_type.
    comp_f = cf.reshape(TB, TC, D).astype(comp_ref.dtype)

    # (TB, TC, D) x (TB, Lp, D) -> (TB, TC, Lp); contracting last dims (NT feed),
    # batch dim 0 — no materialized transpose of prot_f.
    scores = lax.dot_general(
        comp_f, protf_ref[...],
        dimension_numbers=(((2,), (2,)), ((0,), (0,))),
        preferred_element_type=jnp.float32)

    # sigmoid: exp on the EUP, approx reciprocal also on the EUP (VALU stays free
    # for the two mask multiplies).  exp(-x)->inf for very negative x gives 0.
    pred = pl.reciprocal(1.0 + jnp.exp(-scores), approx=True)

    # Pairwise mask = two broadcast multiplies (no K=1 matmul, no masked stores).
    out_ref[...] = (pred * ckeep_ref[...] * pkeep_ref[...]).astype(out_ref.dtype)


def pairwise_output_layer(prot, comp, p_bool_mask, c_bool_mask, params, *,
                          out_dtype=jnp.float32, max_tb=64):
    """prot (B,Lp,D), comp (B,Lc,D), masks (B,L) bool (True = padded).
    Returns (B, Lc, Lp) `out_dtype`, matching PairwiseOutputLayer.forward (eval)."""
    B, Lp, D = prot.shape
    Lc = comp.shape[1]
    in_dtype = prot.dtype
    in_bytes = jnp.dtype(in_dtype).itemsize
    out_bytes = jnp.dtype(out_dtype).itemsize

    # ---- padded problem dims (zero padding keeps the math exact; see kernel) ----
    Lp_p = _round_up(Lp, 128)     # lane-dense output stores
    Lc_p = _round_up(Lc, 16)      # sublane alignment (f32: 8, bf16: 16)
    D_p = _round_up(D, 128)       # lane-aligned feature / contracting dim

    # ---- parameters (nn.Linear does x @ W^T + b); zero-pad to (D_p, D_p) --------
    # Padded input rows of W^T are zero (padded D of x contributes nothing);
    # padded output columns + zero bias give relu(0) = 0 features, which add 0 to
    # the pairwise scores.
    def pad_w(w):
        wt = jnp.asarray(w).T.astype(in_dtype)
        return jnp.pad(wt, ((0, D_p - D), (0, D_p - D)))

    def pad_b(b):
        return jnp.pad(jnp.asarray(b).reshape(1, D).astype(jnp.float32),
                       ((0, 0), (0, D_p - D)))

    wp_t, wc_t = pad_w(params["wp"]), pad_w(params["wc"])
    bp, bc = pad_b(params["bp"]), pad_b(params["bc"])

    # ---- keep-masks (1 = valid), padded positions get keep = 0 ------------------
    p_keep = (1.0 - p_bool_mask.astype(jnp.float32)).reshape(B, 1, Lp)
    c_keep = (1.0 - c_bool_mask.astype(jnp.float32)).reshape(B, Lc, 1)
    p_keep = jnp.pad(p_keep, ((0, 0), (0, 0), (0, Lp_p - Lp)))
    c_keep = jnp.pad(c_keep, ((0, 0), (0, Lc_p - Lc), (0, 0)))

    # ---- generation-aware VMEM budget -------------------------------------------
    try:
        cap_bytes = int(pltpu.get_tpu_info().vmem_capacity_bytes)
    except Exception:
        cap_bytes = 64 * 1024 * 1024              # conservative (v7x-sized)
    vmem_limit = min(int(cap_bytes * 0.75), 112 * 1024 * 1024)   # ~48 MiB v7x / ~96 MiB v5e-v6e
    budget = int(vmem_limit * 0.9)                # headroom for internal scratch

    def vmem_needed(tb, tc):
        v = 0
        v += 2 * tb * Lp_p * D_p * in_bytes               # prot block (dbl-buffered)
        v += 2 * tb * tc * D_p * in_bytes                 # comp block
        v += 2 * tb * 8 * Lp_p * 4                        # p_keep (sublane-padded)
        v += 2 * tb * tc * 128 * 4                        # c_keep (lane-padded to 128)
        v += 2 * tb * tc * Lp_p * out_bytes               # output block
        v += 2 * (2 * D_p * D_p * in_bytes + 2 * 8 * D_p * 4)   # weights + biases
        v += tb * Lp_p * D_p * in_bytes                   # prot_f VMEM scratch
        v += tb * tc * D_p * 4                            # comp_f f32 intermediate
        v += 2 * tb * tc * Lp_p * 4                       # scores + pred f32
        return v

    # tc: largest divisor of Lc_p that is a multiple of 16 and fits with tb = 1.
    tc_candidates = [d for d in range(Lc_p, 15, -16) if Lc_p % d == 0] or [Lc_p]
    tc = next((c for c in tc_candidates if vmem_needed(1, c) <= budget),
              tc_candidates[-1])
    # tb: largest batch tile (<= max_tb) that fits; B is padded to a multiple of tb
    # so awkward/prime B never forces tb = 1.  Larger tb also fills the MXU M dim.
    tb = 1
    for cand in range(min(B, max_tb), 0, -1):
        if vmem_needed(cand, tc) <= budget:
            tb = cand
            break
    B_p = _round_up(B, tb)

    # ---- pad activations / masks to the padded problem size ---------------------
    prot_p = jnp.pad(prot, ((0, B_p - B), (0, Lp_p - Lp), (0, D_p - D)))
    comp_p = jnp.pad(comp, ((0, B_p - B), (0, Lc_p - Lc), (0, D_p - D)))
    p_keep = jnp.pad(p_keep, ((0, B_p - B), (0, 0), (0, 0)))
    c_keep = jnp.pad(c_keep, ((0, B_p - B), (0, 0), (0, 0)))

    out = pl.pallas_call(
        _pairwise_kernel,
        out_shape=jax.ShapeDtypeStruct((B_p, Lc_p, Lp_p), out_dtype),
        grid=(B_p // tb, Lc_p // tc),
        in_specs=[
            pl.BlockSpec((tb, Lp_p, D_p), lambda b, c: (b, 0, 0)),   # prot
            pl.BlockSpec((tb, tc, D_p), lambda b, c: (b, c, 0)),     # comp
            pl.BlockSpec((tb, 1, Lp_p), lambda b, c: (b, 0, 0)),     # p_keep
            pl.BlockSpec((tb, tc, 1), lambda b, c: (b, c, 0)),       # c_keep
            pl.BlockSpec((D_p, D_p), lambda b, c: (0, 0)),           # Wp^T
            pl.BlockSpec((1, D_p), lambda b, c: (0, 0)),             # bp
            pl.BlockSpec((D_p, D_p), lambda b, c: (0, 0)),           # Wc^T
            pl.BlockSpec((1, D_p), lambda b, c: (0, 0)),             # bc
        ],
        out_specs=pl.BlockSpec((tb, tc, Lp_p), lambda b, c: (b, c, 0)),
        scratch_shapes=[pltpu.VMEM((tb, Lp_p, D_p), in_dtype)],      # prot_f cache
        compiler_params=pltpu.CompilerParams(
            dimension_semantics=("parallel", "arbitrary"),
            vmem_limit_bytes=vmem_limit),
    )(prot_p, comp_p, p_keep, c_keep, wp_t, bp, wc_t, bc)

    return out[:B, :Lc, :Lp]


def reference_jax(prot, comp, p_bool_mask, c_bool_mask, params):
    """Pure-JAX reproduction of the PyTorch forward (correctness check)."""
    prot_f = jax.nn.relu(prot @ params["wp"].T + params["bp"])
    comp_f = jax.nn.relu(comp @ params["wc"].T + params["bc"])
    pred = jax.nn.sigmoid(jnp.einsum('bcd,bpd->bcp', comp_f, prot_f))
    keep_p = 1.0 - p_bool_mask.astype(jnp.float32)
    keep_c = 1.0 - c_bool_mask.astype(jnp.float32)
    mask = keep_c[:, :, None] * keep_p[:, None, :]
    return pred * mask


if __name__ == "__main__":
    B, Lp, Lc, D = 2, 16, 8, 32

    key = jax.random.PRNGKey(0)
    kp, kc, k1, k2, k3, k4 = jax.random.split(key, 6)

    prot = jax.random.normal(kp, (B, Lp, D), dtype=jnp.float32)
    comp = jax.random.normal(kc, (B, Lc, D), dtype=jnp.float32)

    # bool masks: True = padded position (last tokens padded)
    p_bool_mask = jnp.arange(Lp)[None, :] >= jnp.array([Lp, Lp - 4])[:, None]
    c_bool_mask = jnp.arange(Lc)[None, :] >= jnp.array([Lc, Lc - 2])[:, None]

    # deterministic synthetic parameters (nn.Linear shapes: weight (out, in))
    params = {
        "wp": 0.1 * jax.random.normal(k1, (D, D), dtype=jnp.float32),
        "bp": 0.1 * jax.random.normal(k2, (D,), dtype=jnp.float32),
        "wc": 0.1 * jax.random.normal(k3, (D, D), dtype=jnp.float32),
        "bc": 0.1 * jax.random.normal(k4, (D,), dtype=jnp.float32),
    }

    # TODO(synk): nn.Dropout is modeled as identity (eval-mode semantics).
    out = pairwise_output_layer(prot, comp, p_bool_mask, c_bool_mask, params)
    out = jax.block_until_ready(out)

    ref = reference_jax(prot, comp, p_bool_mask, c_bool_mask, params)
    assert out.shape == (B, Lc, Lp)
    assert jnp.allclose(out, ref, rtol=1e-2, atol=1e-2), (out, ref)

    print("KERNEL_OK")
</pallas_src>

<mosaic_0001>
module attributes {stable_mosaic.version = 11 : i64} {
  func.func @_pairwise_kernel(%arg0: i32, %arg1: i32, %arg2: memref<2x128x128xf32, #tpu.memory_space<vmem>>, %arg3: memref<2x16x128xf32, #tpu.memory_space<vmem>>, %arg4: memref<2x1x128xf32, #tpu.memory_space<vmem>>, %arg5: memref<2x16x1xf32, #tpu.memory_space<vmem>>, %arg6: memref<128x128xf32, #tpu.memory_space<vmem>>, %arg7: memref<1x128xf32, #tpu.memory_space<vmem>>, %arg8: memref<128x128xf32, #tpu.memory_space<vmem>>, %arg9: memref<1x128xf32, #tpu.memory_space<vmem>>, %arg10: memref<2x16x128xf32, #tpu.memory_space<vmem>>, %arg11: memref<2x128x128xf32, #tpu.memory_space<vmem>>) attributes {dimension_semantics = [#tpu.dimension_semantics<parallel>, #tpu.dimension_semantics<arbitrary>], iteration_bounds = array<i64: 1, 1>, scalar_prefetch = 0 : i64, scratch_operands = 1 : i64, tpu.core_type = #tpu.core_type<tc>, window_params = [{transform_indices = @transform_0, window_bounds = array<i64: 2, 128, 128>}, {transform_indices = @transform_1, window_bounds = array<i64: 2, 16, 128>}, {transform_indices = @transform_2, window_bounds = array<i64: 2, 1, 128>}, {transform_indices = @transform_3, window_bounds = array<i64: 2, 16, 1>}, {pipeline_mode = #tpu.pipeline_mode<synchronous>, transform_indices = @transform_4, window_bounds = array<i64: 128, 128>}, {pipeline_mode = #tpu.pipeline_mode<synchronous>, transform_indices = @transform_5, window_bounds = array<i64: 1, 128>}, {pipeline_mode = #tpu.pipeline_mode<synchronous>, transform_indices = @transform_6, window_bounds = array<i64: 128, 128>}, {pipeline_mode = #tpu.pipeline_mode<synchronous>, transform_indices = @transform_7, window_bounds = array<i64: 1, 128>}, {transform_indices = @transform_8, window_bounds = array<i64: 2, 16, 128>}]} {
    %c0_i32 = arith.constant 0 : i32
    %0 = arith.cmpi eq, %arg1, %c0_i32 : i32
    %1 = arith.extui %0 : i1 to i32
    %c0_i32_0 = arith.constant 0 : i32
    %2 = arith.cmpi ne, %1, %c0_i32_0 : i32
    scf.if %2 {
      %c0_23 = arith.constant 0 : index
      %c0_24 = arith.constant 0 : index
      %c0_25 = arith.constant 0 : index
      %28 = vector.load %arg2[%c0_23, %c0_24, %c0_25] : memref<2x128x128xf32, #tpu.memory_space<vmem>>, vector<2x128x128xf32>
      %29 = vector.shape_cast %28 : vector<2x128x128xf32> to vector<256x128xf32>
      %c0_26 = arith.constant 0 : index
      %c0_27 = arith.constant 0 : index
      %30 = vector.load %arg6[%c0_26, %c0_27] : memref<128x128xf32, #tpu.memory_space<vmem>>, vector<128x128xf32>
      %cst_28 = arith.constant dense<0.000000e+00> : vector<256x128xf32>
      %31 = tpu.matmul %29, %30, %cst_28 {dimension_numbers = #tpu.dot_dimension_numbers<[1], [0], [0], [1], [0, 0, 1, 1], [], []>} : vector<256x128xf32>, vector<128x128xf32>, vector<256x128xf32> -> vector<256x128xf32>
      %c0_29 = arith.constant 0 : index
      %c0_30 = arith.constant 0 : index
      %32 = vector.load %arg7[%c0_29, %c0_30] : memref<1x128xf32, #tpu.memory_space<vmem>>, vector<1x128xf32>
      %33 = vector.broadcast %32 : vector<1x128xf32> to vector<256x128xf32>
      %34 = arith.addf %31, %33 : vector<256x128xf32>
      %cst_31 = arith.constant 0.000000e+00 : f32
      %35 = vector.broadcast %cst_31 : f32 to vector<256x128xf32>
      %36 = arith.maximumf %34, %35 : vector<256x128xf32>
      %37 = vector.shape_cast %36 : vector<256x128xf32> to vector<2x128x128xf32>
      %c0_32 = arith.constant 0 : index
      %c0_33 = arith.constant 0 : index
      %c0_34 = arith.constant 0 : index
      %38 = vector.load %arg11[%c0_32, %c0_33, %c0_34] : memref<2x128x128xf32, #tpu.memory_space<vmem>>, vector<2x128x128xf32>
      tpu.vector_store %arg11[%c0_32, %c0_33, %c0_34], %37 {strides = array<i32>} : memref<2x128x128xf32, #tpu.memory_space<vmem>>, vector<2x128x128xf32>,
    } else {
    }
    %c0 = arith.constant 0 : index
    %c0_1 = arith.constant 0 : index
    %c0_2 = arith.constant 0 : index
    %3 = vector.load %arg3[%c0, %c0_1, %c0_2] : memref<2x16x128xf32, #tpu.memory_space<vmem>>, vector<2x16x128xf32>
    %4 = vector.shape_cast %3 : vector<2x16x128xf32> to vector<32x128xf32>
    %c0_3 = arith.constant 0 : index
    %c0_4 = arith.constant 0 : index
    %5 = vector.load %arg8[%c0_3, %c0_4] : memref<128x128xf32, #tpu.memory_space<vmem>>, vector<128x128xf32>
    %cst = arith.constant dense<0.000000e+00> : vector<32x128xf32>
    %6 = tpu.matmul %4, %5, %cst {dimension_numbers = #tpu.dot_dimension_numbers<[1], [0], [0], [1], [0, 0, 1, 1], [], []>} : vector<32x128xf32>, vector<128x128xf32>, vector<32x128xf32> -> vector<32x128xf32>
    %c0_5 = arith.constant 0 : index
    %c0_6 = arith.constant 0 : index
    %7 = vector.load %arg9[%c0_5, %c0_6] : memref<1x128xf32, #tpu.memory_space<vmem>>, vector<1x128xf32>
    %8 = vector.broadcast %7 : vector<1x128xf32> to vector<32x128xf32>
    %9 = arith.addf %6, %8 : vector<32x128xf32>
    %cst_7 = arith.constant 0.000000e+00 : f32
    %10 = vector.broadcast %cst_7 : f32 to vector<32x128xf32>
    %11 = arith.maximumf %9, %10 : vector<32x128xf32>
    %12 = vector.shape_cast %11 : vector<32x128xf32> to vector<2x16x128xf32>
    %c0_8 = arith.constant 0 : index
    %c0_9 = arith.constant 0 : index
    %c0_10 = arith.constant 0 : index
    %13 = vector.load %arg11[%c0_8, %c0_9, %c0_10] : memref<2x128x128xf32, #tpu.memory_space<vmem>>, vector<2x128x128xf32>
    %cst_11 = arith.constant dense<0.000000e+00> : vector<2x16x128xf32>
    %14 = tpu.matmul %12, %13, %cst_11 {dimension_numbers = #tpu.dot_dimension_numbers<[2], [2], [1], [1], [0, 0, 0, 1, 1, 1], [0], [0]>} : vector<2x16x128xf32>, vector<2x128x128xf32>, vector<2x16x128xf32> -> vector<2x16x128xf32>
    %cst_12 = arith.constant 0.000000e+00 : f32
    %15 = vector.broadcast %cst_12 : f32 to vector<2x16x128xf32>
    %16 = arith.subf %15, %14 : vector<2x16x128xf32>
    %17 = math.exp %16 : vector<2x16x128xf32>
    %cst_13 = arith.constant 1.000000e+00 : f32
    %18 = vector.broadcast %cst_13 : f32 to vector<2x16x128xf32>
    %19 = arith.addf %18, %17 : vector<2x16x128xf32>
    %20 = tpu.reciprocal %19 {approx = true} : vector<2x16x128xf32> -> vector<2x16x128xf32>
    %c0_14 = arith.constant 0 : index
    %c0_15 = arith.constant 0 : index
    %c0_16 = arith.constant 0 : index
    %21 = vector.load %arg5[%c0_14, %c0_15, %c0_16] : memref<2x16x1xf32, #tpu.memory_space<vmem>>, vector<2x16x1xf32>
    %22 = vector.broadcast %21 : vector<2x16x1xf32> to vector<2x16x128xf32>
    %23 = arith.mulf %20, %22 : vector<2x16x128xf32>
    %c0_17 = arith.constant 0 : index
    %c0_18 = arith.constant 0 : index
    %c0_19 = arith.constant 0 : index
    %24 = vector.load %arg4[%c0_17, %c0_18, %c0_19] : memref<2x1x128xf32, #tpu.memory_space<vmem>>, vector<2x1x128xf32>
    %25 = vector.broadcast %24 : vector<2x1x128xf32> to vector<2x16x128xf32>
    %26 = arith.mulf %23, %25 : vector<2x16x128xf32>
    %c0_20 = arith.constant 0 : index
    %c0_21 = arith.constant 0 : index
    %c0_22 = arith.constant 0 : index
    %27 = vector.load %arg10[%c0_20, %c0_21, %c0_22] : memref<2x16x128xf32, #tpu.memory_space<vmem>>, vector<2x16x128xf32>
    tpu.vector_store %arg10[%c0_20, %c0_21, %c0_22], %26 {strides = array<i32>} : memref<2x16x128xf32, #tpu.memory_space<vmem>>, vector<2x16x128xf32>,
    return
  }
  func.func @transform_0(%arg0: i32, %arg1: i32) -> (i32, i32, i32) {
    %c0_i32 = arith.constant 0 : i32
    %c0_i32_0 = arith.constant 0 : i32
    %c0_i32_1 = arith.constant 0 : i32
    return %arg0, %c0_i32, %c0_i32_0 : i32, i32, i32
  }
  func.func @transform_1(%arg0: i32, %arg1: i32) -> (i32, i32, i32) {
    %c0_i32 = arith.constant 0 : i32
    %c0_i32_0 = arith.constant 0 : i32
    return %arg0, %arg1, %c0_i32 : i32, i32, i32
  }
  func.func @transform_2(%arg0: i32, %arg1: i32) -> (i32, i32, i32) {
    %c0_i32 = arith.constant 0 : i32
    %c0_i32_0 = arith.constant 0 : i32
    %c0_i32_1 = arith.constant 0 : i32
    return %arg0, %c0_i32, %c0_i32_0 : i32, i32, i32
  }
  func.func @transform_3(%arg0: i32, %arg1: i32) -> (i32, i32, i32) {
    %c0_i32 = arith.constant 0 : i32
    %c0_i32_0 = arith.constant 0 : i32
    return %arg0, %arg1, %c0_i32 : i32, i32, i32
  }
  func.func @transform_4(%arg0: i32, %arg1: i32) -> (i32, i32) {
    %c0_i32 = arith.constant 0 : i32
    %c0_i32_0 = arith.constant 0 : i32
    %c0_i32_1 = arith.constant 0 : i32
    return %c0_i32, %c0_i32_0 : i32, i32
  }
  func.func @transform_5(%arg0: i32, %arg1: i32) -> (i32, i32) {
    %c0_i32 = arith.constant 0 : i32
    %c0_i32_0 = arith.constant 0 : i32
    %c0_i32_1 = arith.constant 0 : i32
    return %c0_i32, %c0_i32_0 : i32, i32
  }
  func.func @transform_6(%arg0: i32, %arg1: i32) -> (i32, i32) {
    %c0_i32 = arith.constant 0 : i32
    %c0_i32_0 = arith.constant 0 : i32
    %c0_i32_1 = arith.constant 0 : i32
    return %c0_i32, %c0_i32_0 : i32, i32
  }
  func.func @transform_7(%arg0: i32, %arg1: i32) -> (i32, i32) {
    %c0_i32 = arith.constant 0 : i32
    %c0_i32_0 = arith.constant 0 : i32
    %c0_i32_1 = arith.constant 0 : i32
    return %c0_i32, %c0_i32_0 : i32, i32
  }
  func.func @transform_8(%arg0: i32, %arg1: i32) -> (i32, i32, i32) {
    %c0_i32 = arith.constant 0 : i32
    %c0_i32_0 = arith.constant 0 : i32
    return %arg0, %arg1, %c0_i32 : i32, i32, i32
  }
}

</mosaic_0001>

<llo_original>
// kernel: tpu_custom_call.1
$region0: #{tpu_custom_call.1}
  #allocation0 [shape = 'u32[]', space=smem, size = 0x4, offset = 0x4, fixed_abs, tag = 'smem constant byte address 0x4 - core index']
  #allocation1 [shape = 'u32[144,128]{1,0:T(1,128)}', space=vmem, size = 0x12000, scoped, tag = 'internal scratch']
  #allocation2 [shape = 'f32[2,128,128]{2,1,0:T(8,128)}', space=vmem, size = 0x20000, scoped, tag = 'scratch operand']
  %s0 = inlined_call_operand.hbm [shape: f32[2,128,128], index: 0, kind: input, shape index: {}]
  %s1 = inlined_call_operand.vmem [shape: f32[2,16,128], index: 1, kind: input, shape index: {}]
  %s2 = inlined_call_operand.vmem [shape: f32[2,1,128], index: 2, kind: input, shape index: {}]
  %s3 = inlined_call_operand.vmem [shape: f32[2,16,1], index: 3, kind: input, shape index: {}]
  %s4 = inlined_call_operand.hbm [shape: f32[128,128], index: 4, kind: input, shape index: {}]
  %s5 = inlined_call_operand.vmem [shape: f32[1,128], index: 5, kind: input, shape index: {}]
  %s6 = inlined_call_operand.hbm [shape: f32[128,128], index: 6, kind: input, shape index: {}]
  %s7 = inlined_call_operand.vmem [shape: f32[1,128], index: 7, kind: input, shape index: {}]
  %s8 = inlined_call_operand.hbm [shape: f32[2,16,128], index: 8, kind: output, shape index: {}]
  %s9 = sld [smem:[#allocation0]]
  $region58: #{tpu_custom_call.1} parent=0
    _
  %s11 = ssub.s32 1, %s9
  %s12 = scalar_select 0, %s11, %s9
  $region1: #{tpu_custom_call.1} parent=0
    #allocation3 [shape = 'u8[131072]{0}', space=vmem, size = 0x20000, scoped, tag = 'input window, operand 0, single buffered']
    #allocation4 [shape = 's32[1]{0}', space=sflag, size = 0x4, scoped, tag = 'scoped memory for tpu_custom_call.1']
    #allocation5 [shape = 's32[1]{0}', space=sflag, size = 0x4, scoped, tag = 'scoped memory for tpu_custom_call.1']
    #allocation6 [shape = 'u8[65536]{0}', space=vmem, size = 0x10000, scoped, tag = 'input window, operand 4, single buffered']
    #allocation7 [shape = 's32[1]{0}', space=sflag, size = 0x4, scoped, tag = 'scoped memory for tpu_custom_call.1']
    #allocation8 [shape = 'u8[65536]{0}', space=vmem, size = 0x10000, scoped, tag = 'input window, operand 6, single buffered']
    #allocation9 [shape = 'u8[16384]{0}', space=vmem, size = 0x4000, scoped, tag = 'output window, operand 0, single buffered']
    %13 = vsyncpa [#allocation4], 0
    %14 = vsyncpa [#allocation7], 0
    %15 = vsyncpa [#allocation5], 0
    // Predicated region
    $region2: #{tpu_custom_call.1} parent=1 // pred_check
      _
    $region3: #{tpu_custom_call.1} parent=1 // pred_check_branch
      %17 = sbr.rel (0) target = $region5
    $region4: #{tpu_custom_call.1} parent=1 // pred_region
      %s19 = ssub.s32 4096, 4096
      %20 = vsyncadd [#allocation4], %s19
      %s21 = sshll.u32 [#allocation3], 4
      %s22 = int_to_ptr.vmem [resolvable:$true] %s21
      %27 = dma.hbm_to_vmem [thread:$0]  %s0, 4096, %s22, [#allocation4], 128, 128, 8
    $region5: #{tpu_custom_call.1} parent=1 // pred_fallthru
      _
    // Predicated region
    $region6: #{tpu_custom_call.1} parent=1 // pred_check
      _
    $region7: #{tpu_custom_call.1} parent=1 // pred_check_branch
      %29 = sbr.rel (0) target = $region9
    $region8: #{tpu_custom_call.1} parent=1 // pred_region
      _
    $region9: #{tpu_custom_call.1} parent=1 // pred_fallthru
      _
    // Predicated region
    $region10: #{tpu_custom_call.1} parent=1 // pred_check
      _
    $region11: #{tpu_custom_call.1} parent=1 // pred_check_branch
      %31 = sbr.rel (0) target = $region13
    $region12: #{tpu_custom_call.1} parent=1 // pred_region
      _
    $region13: #{tpu_custom_call.1} parent=1 // pred_fallthru
      _
    // Predicated region
    $region14: #{tpu_custom_call.1} parent=1 // pred_check
      _
    $region15: #{tpu_custom_call.1} parent=1 // pred_check_branch
      %33 = sbr.rel (0) target = $region17
    $region16: #{tpu_custom_call.1} parent=1 // pred_region
      _
    $region17: #{tpu_custom_call.1} parent=1 // pred_fallthru
      _
    // Predicated region
    $region18: #{tpu_custom_call.1} parent=1 // pred_check
      _
    $region19: #{tpu_custom_call.1} parent=1 // pred_check_branch
      %35 = sbr.rel (0) target = $region21
    $region20: #{tpu_custom_call.1} parent=1 // pred_region
      %s37 = ssub.s32 2048, 2048
      %38 = vsyncadd [#allocation7], %s37
      %s39 = sshll.u32 [#allocation6], 4
      %s40 = int_to_ptr.vmem [resolvable:$true] %s39
      %45 = dma.hbm_to_vmem [thread:$0]  %s4, 2048, %s40, [#allocation7], 128, 128, 8
    $region21: #{tpu_custom_call.1} parent=1 // pred_fallthru
      _
    // Predicated region
    $region22: #{tpu_custom_call.1} parent=1 // pred_check
      _
    $region23: #{tpu_custom_call.1} parent=1 // pred_check_branch
      %47 = sbr.rel (0) target = $region25
    $region24: #{tpu_custom_call.1} parent=1 // pred_region
      _
    $region25: #{tpu_custom_call.1} parent=1 // pred_fallthru
      _
    // Predicated region
    $region26: #{tpu_custom_call.1} parent=1 // pred_check
      _
    $region27: #{tpu_custom_call.1} parent=1 // pred_check_branch
      %49 = sbr.rel (0) target = $region29
    $region28: #{tpu_custom_call.1} parent=1 // pred_region
      %s51 = ssub.s32 2048, 2048
      %52 = vsyncadd [#allocation7], %s51
      %s53 = sshll.u32 [#allocation8], 4
      %s54 = int_to_ptr.vmem [resolvable:$true] %s53
      %59 = dma.hbm_to_vmem [thread:$0]  %s6, 2048, %s54, [#allocation7], 128, 128, 8
    $region29: #{tpu_custom_call.1} parent=1 // pred_fallthru
      _
    // Predicated region
    $region30: #{tpu_custom_call.1} parent=1 // pred_check
      _
    $region31: #{tpu_custom_call.1} parent=1 // pred_check_branch
      %61 = sbr.rel (0) target = $region33
    $region32: #{tpu_custom_call.1} parent=1 // pred_region
      _
    $region33: #{tpu_custom_call.1} parent=1 // pred_fallthru
      _
    // Predicated region
    $region34: #{tpu_custom_call.1} parent=1 // pred_check
      _
    $region35: #{tpu_custom_call.1} parent=1 // pred_check_branch
      %63 = sbr.rel (0) target = $region37
    $region36: #{tpu_custom_call.1} parent=1 // pred_region
      %64 = dma.done [#allocation4], 4096
    $region37: #{tpu_custom_call.1} parent=1 // pred_fallthru
      _
    // Predicated region
    $region38: #{tpu_custom_call.1} parent=1 // pred_check
      _
    $region39: #{tpu_custom_call.1} parent=1 // pred_check_branch
      %66 = sbr.rel (0) target = $region41
    $region40: #{tpu_custom_call.1} parent=1 // pred_region
      %67 = dma.done [#allocation7], 2048
    $region41: #{tpu_custom_call.1} parent=1 // pred_fallthru
      _
    // Predicated region
    $region42: #{tpu_custom_call.1} parent=1 // pred_check
      _
    $region43: #{tpu_custom_call.1} parent=1 // pred_check_branch
      %69 = sbr.rel (0) target = $region45
    $region44: #{tpu_custom_call.1} parent=1 // pred_region
      %70 = dma.done [#allocation7], 2048
    $region45: #{tpu_custom_call.1} parent=1 // pred_fallthru
      _
    %p71 = scmp.eq.s32.totalorder 0, 0
    // Predicated region
    $region46: #{tpu_custom_call.1} parent=1 // pred_check
      %p72 = pneg %p71
    $region47: #{tpu_custom_call.1} parent=1 // pred_check_branch
      %74 = sbr.rel (%p72) target = $region49
    $region48: #{tpu_custom_call.1} parent=1 // pred_region
      %v75 = vld [vmem:[#allocation3] sm:$0xff]
      %v76 = vld [vmem:[#allocation3 + $0x8] sm:$0xff]
      %v77 = vld [vmem:[#allocation3 + $0x10] sm:$0xff]
      %v78 = vld [vmem:[#allocation3 + $0x18] sm:$0xff]
      %v79 = vld [vmem:[#allocation3 + $0x20] sm:$0xff]
      %v80 = vld [vmem:[#allocation3 + $0x28] sm:$0xff]
      %v81 = vld [vmem:[#allocation3 + $0x30] sm:$0xff]
      %v82 = vld [vmem:[#allocation3 + $0x38] sm:$0xff]
      %v83 = vld [vmem:[#allocation3 + $0x40] sm:$0xff]
      %v84 = vld [vmem:[#allocation3 + $0x48] sm:$0xff]
      %v85 = vld [vmem:[#allocation3 + $0x50] sm:$0xff]
      %v86 = vld [vmem:[#allocation3 + $0x58] sm:$0xff]
      %v87 = vld [vmem:[#allocation3 + $0x60] sm:$0xff]
      %v88 = vld [vmem:[#allocation3 + $0x68] sm:$0xff]
      %v89 = vld [vmem:[#allocation3 + $0x70] sm:$0xff]
      %v90 = vld [vmem:[#allocation3 + $0x78] sm:$0xff]
      %v91 = vld [vmem:[#allocation3 + $0x80] sm:$0xff]
      %v92 = vld [vmem:[#allocation3 + $0x88] sm:$0xff]
      %v93 = vld [vmem:[#allocation3 + $0x90] sm:$0xff]
      %v94 = vld [vmem:[#allocation3 + $0x98] sm:$0xff]
      %v95 = vld [vmem:[#allocation3 + $0xa0] sm:$0xff]
      %v96 = vld [vmem:[#allocation3 + $0xa8] sm:$0xff]
      %v97 = vld [vmem:[#allocation3 + $0xb0] sm:$0xff]
      %v98 = vld [vmem:[#allocation3 + $0xb8] sm:$0xff]
      %v99 = vld [vmem:[#allocation3 + $0xc0] sm:$0xff]
      %v100 = vld [vmem:[#allocation3 + $0xc8] sm:$0xff]
      %v101 = vld [vmem:[#allocation3 + $0xd0] sm:$0xff]
      %v102 = vld [vmem:[#allocation3 + $0xd8] sm:$0xff]
      %v103 = vld [vmem:[#allocation3 + $0xe0] sm:$0xff]
      %v104 = vld [vmem:[#allocation3 + $0xe8] sm:$0xff]
      %v105 = vld [vmem:[#allocation3 + $0xf0] sm:$0xff]
      %v106 = vld [vmem:[#allocation3 + $0xf8] sm:$0xff]
      %v107 = vld [vmem:[#allocation6] sm:$0xff]
      %v108 = vld [vmem:[#allocation6 + $0x8] sm:$0xff]
      %v109 = vld [vmem:[#allocation6 + $0x10] sm:$0xff]
      %v110 = vld [vmem:[#allocation6 + $0x18] sm:$0xff]
      %v111 = vld [vmem:[#allocation6 + $0x20] sm:$0xff]
      %v112 = vld [vmem:[#allocation6 + $0x28] sm:$0xff]
      %v113 = vld [vmem:[#allocation6 + $0x30] sm:$0xff]
      %v114 = vld [vmem:[#allocation6 + $0x38] sm:$0xff]
      %v115 = vld [vmem:[#allocation6 + $0x40] sm:$0xff]
      %v116 = vld [vmem:[#allocation6 + $0x48] sm:$0xff]
      %v117 = vld [vmem:[#allocation6 + $0x50] sm:$0xff]
      %v118 = vld [vmem:[#allocation6 + $0x58] sm:$0xff]
      %v119 = vld [vmem:[#allocation6 + $0x60] sm:$0xff]
      %v120 = vld [vmem:[#allocation6 + $0x68] sm:$0xff]
      %v121 = vld [vmem:[#allocation6 + $0x70] sm:$0xff]
      %v122 = vld [vmem:[#allocation6 + $0x78] sm:$0xff]
      %v123 = vld [vmem:[%s5] sm:$0x1]
      %v125 = vlaneseq
      %v126 = vshrl.u32 %v125, 7
      %v127 = vsub.s32 0, %v126
      %v128 = vrot.slane %v123, %v127
      %130 = vmatprep.subr.mxu0 0.0
      %131 = vmatpush1.msra.mxu0 %v107
      %132 = vmatprep.subr.mxu0 0.0
      %133 = vmatpush1.msra.mxu0 %v108
      %134 = vmatprep.subr.mxu0 0.0
      %135 = vmatpush1.msra.mxu0 %v109
      %136 = vmatprep.subr.mxu0 0.0
      %137 = vmatpush1.msra.mxu0 %v110
      %138 = vmatprep.subr.mxu0 0.0
      %139 = vmatpush1.msra.mxu0 %v111
      %140 = vmatprep.subr.mxu0 0.0
      %141 = vmatpush1.msra.mxu0 %v112
      %142 = vmatprep.subr.mxu0 0.0
      %143 = vmatpush1.msra.mxu0 %v113
      %144 = vmatprep.subr.mxu0 0.0
      %145 = vmatpush1.msra.mxu0 %v114
      %146 = vmatprep.subr.mxu0 0.0
      %147 = vmatpush1.msra.mxu0 %v115
      %148 = vmatprep.subr.mxu0 0.0
      %149 = vmatpush1.msra.mxu0 %v116
      %150 = vmatprep.subr.mxu0 0.0
      %151 = vmatpush1.msra.mxu0 %v117
      %152 = vmatprep.subr.mxu0 0.0
      %153 = vmatpush1.msra.mxu0 %v118
      %154 = vmatprep.subr.mxu0 0.0
      %155 = vmatpush1.msra.mxu0 %v119
      %156 = vmatprep.subr.mxu0 0.0
      %157 = vmatpush1.msra.mxu0 %v120
      %158 = vmatprep.subr.mxu0 0.0
      %159 = vmatpush1.msra.mxu0 %v121
      %160 = vmatprep.subr.mxu0 0.0
      %161 = vmatpush1.msra.mxu0 %v122
      %162 = vmatprep.subr.mxu0 0.0
      %163 = vmatpush1.msra.mxu0 0.0
      %164 = vmatprep.subr.mxu0 0.0
      %165 = vmatpush1.msra.mxu0 0.0
      %166 = vmatprep.subr.mxu0 0.0
      %167 = vmatpush1.msra.mxu0 0.0
      %168 = vmatprep.subr.mxu0 0.0
      %169 = vmatpush1.msra.mxu0 0.0
      %170 = vmatprep.subr.mxu0 0.0
      %171 = vmatpush1.msra.mxu0 0.0
      %172 = vmatprep.subr.mxu0 0.0
      %173 = vmatpush1.msra.mxu0 0.0
      %174 = vmatprep.subr.mxu0 0.0
      %175 = vmatpush1.msra.mxu0 0.0
      %176 = vmatprep.subr.mxu0 0.0
      %177 = vmatpush1.msra.mxu0 0.0
      %178 = vmatprep.subr.mxu0 0.0
      %179 = vmatpush1.msra.mxu0 0.0
      %180 = vmatprep.subr.mxu0 0.0
      %181 = vmatpush1.msra.mxu0 0.0
      %182 = vmatprep.subr.mxu0 0.0
      %183 = vmatpush1.msra.mxu0 0.0
      %184 = vmatprep.subr.mxu0 0.0
      %185 = vmatpush1.msra.mxu0 0.0
      %186 = vmatprep.subr.mxu0 0.0
      %187 = vmatpush1.msra.mxu0 0.0
      %188 = vmatprep.subr.mxu0 0.0
      %189 = vmatpush1.msra.mxu0 0.0
      %190 = vmatprep.subr.mxu0 0.0
      %191 = vmatpush1.msra.mxu0 0.0
      %192 = vmatprep.subr.mxu0 0.0
      %193 = vmatpush1.msra.mxu0 0.0
      %194 = vmatprep.mubr.f32.mxu0 0.0
      %195 = vmatmul.mubr.f32.gmra.mrb[0].mxu0 %v75
      %v196 = vpop.f32.mrb[0].mxu0
      %v197 = vadd.f32 %v128, %v196
      %v198 = vpop.f32.mrb[0].mxu0
      %199 = vmatprep.mubr.f32.mxu0 0.0
      %200 = vmatmul.mubr.f32.gmra.mrb[0].mxu0 %v76
      %v201 = vpop.f32.mrb[0].mxu0
      %v202 = vadd.f32 %v128, %v201
      %v203 = vpop.f32.mrb[0].mxu0
      %204 = vmatprep.mubr.f32.mxu0 0.0
      %205 = vmatmul.mubr.f32.gmra.mrb[0].mxu0 %v77
      %v206 = vpop.f32.mrb[0].mxu0
      %v207 = vadd.f32 %v128, %v206
      %v208 = vpop.f32.mrb[0].mxu0
      %209 = vmatprep.mubr.f32.mxu0 0.0
      %210 = vmatmul.mubr.f32.gmra.mrb[0].mxu0 %v78
      %v211 = vpop.f32.mrb[0].mxu0
      %v212 = vadd.f32 %v128, %v211
      %v213 = vpop.f32.mrb[0].mxu0
      %214 = vmatprep.mubr.f32.mxu0 0.0
      %215 = vmatmul.mubr.f32.gmra.mrb[0].mxu0 %v79
      %v216 = vpop.f32.mrb[0].mxu0
      %v217 = vadd.f32 %v128, %v216
      %v218 = vpop.f32.mrb[0].mxu0
      %219 = vmatprep.mubr.f32.mxu0 0.0
      %220 = vmatmul.mubr.f32.gmra.mrb[0].mxu0 %v80
      %v221 = vpop.f32.mrb[0].mxu0
      %v222 = vadd.f32 %v128, %v221
      %v223 = vpop.f32.mrb[0].mxu0
      %224 = vmatprep.mubr.f32.mxu0 0.0
      %225 = vmatmul.mubr.f32.gmra.mrb[0].mxu0 %v81
      %v226 = vpop.f32.mrb[0].mxu0
      %v227 = vadd.f32 %v128, %v226
      %v228 = vpop.f32.mrb[0].mxu0
      %229 = vmatprep.mubr.f32.mxu0 0.0
      %230 = vmatmul.mubr.f32.gmra.mrb[0].mxu0 %v82
      %v231 = vpop.f32.mrb[0].mxu0
      %v232 = vadd.f32 %v128, %v231
      %v233 = vpop.f32.mrb[0].mxu0
      %234 = vmatprep.mubr.f32.mxu0 0.0
      %235 = vmatmul.mubr.f32.gmra.mrb[0].mxu0 %v83
      %v236 = vpop.f32.mrb[0].mxu0
      %v237 = vadd.f32 %v128, %v236
      %v238 = vpop.f32.mrb[0].mxu0
      %239 = vmatprep.mubr.f32.mxu0 0.0
      %240 = vmatmul.mubr.f32.gmra.mrb[0].mxu0 %v84
      %v241 = vpop.f32.mrb[0].mxu0
      %v242 = vadd.f32 %v128, %v241
      %v243 = vpop.f32.mrb[0].mxu0
      %244 = vmatprep.mubr.f32.mxu0 0.0
      %245 = vmatmul.mubr.f32.gmra.mrb[0].mxu0 %v85
      %v246 = vpop.f32.mrb[0].mxu0
      %v247 = vadd.f32 %v128, %v246
      %v248 = vpop.f32.mrb[0].mxu0
      %249 = vmatprep.mubr.f32.mxu0 0.0
      %250 = vmatmul.mubr.f32.gmra.mrb[0].mxu0 %v86
      %v251 = vpop.f32.mrb[0].mxu0
      %v252 = vadd.f32 %v128, %v251
      %v253 = vpop.f32.mrb[0].mxu0
      %254 = vmatprep.mubr.f32.mxu0 0.0
      %255 = vmatmul.mubr.f32.gmra.mrb[0].mxu0 %v87
      %v256 = vpop.f32.mrb[0].mxu0
      %v257 = vadd.f32 %v128, %v256
      %v258 = vpop.f32.mrb[0].mxu0
      %259 = vmatprep.mubr.f32.mxu0 0.0
      %260 = vmatmul.mubr.f32.gmra.mrb[0].mxu0 %v88
      %v261 = vpop.f32.mrb[0].mxu0
      %v262 = vadd.f32 %v128, %v261
      %v263 = vpop.f32.mrb[0].mxu0
      %264 = vmatprep.mubr.f32.mxu0 0.0
      %265 = vmatmul.mubr.f32.gmra.mrb[0].mxu0 %v89
      %v266 = vpop.f32.mrb[0].mxu0
      %v267 = vadd.f32 %v128, %v266
      %v268 = vpop.f32.mrb[0].mxu0
      %269 = vmatprep.mubr.f32.mxu0 0.0
      %270 = vmatmul.mubr.f32.gmra.mrb[0].mxu0 %v90
      %v271 = vpop.f32.mrb[0].mxu0
      %v272 = vadd.f32 %v128, %v271
      %v273 = vpop.f32.mrb[0].mxu0
      %274 = vmatprep.mubr.f32.mxu0 0.0
      %275 = vmatmul.mubr.f32.gmra.mrb[0].mxu0 %v91
      %v276 = vpop.f32.mrb[0].mxu0
      %v277 = vadd.f32 %v128, %v276
      %v278 = vpop.f32.mrb[0].mxu0
      %279 = vmatprep.mubr.f32.mxu0 0.0
      %280 = vmatmul.mubr.f32.gmra.mrb[0].mxu0 %v92
      %v281 = vpop.f32.mrb[0].mxu0
      %v282 = vadd.f32 %v128, %v281
      %v283 = vpop.f32.mrb[0].mxu0
      %284 = vmatprep.mubr.f32.mxu0 0.0
      %285 = vmatmul.mubr.f32.gmra.mrb[0].mxu0 %v93
      %v286 = vpop.f32.mrb[0].mxu0
      %v287 = vadd.f32 %v128, %v286
      %v288 = vpop.f32.mrb[0].mxu0
      %289 = vmatprep.mubr.f32.mxu0 0.0
      %290 = vmatmul.mubr.f32.gmra.mrb[0].mxu0 %v94
      %v291 = vpop.f32.mrb[0].mxu0
      %v292 = vadd.f32 %v128, %v291
      %v293 = vpop.f32.mrb[0].mxu0
      %294 = vmatprep.mubr.f32.mxu0 0.0
      %295 = vmatmul.mubr.f32.gmra.mrb[0].mxu0 %v95
      %v296 = vpop.f32.mrb[0].mxu0
      %v297 = vadd.f32 %v128, %v296
      %v298 = vpop.f32.mrb[0].mxu0
      %299 = vmatprep.mubr.f32.mxu0 0.0
      %300 = vmatmul.mubr.f32.gmra.mrb[0].mxu0 %v96
      %v301 = vpop.f32.mrb[0].mxu0
      %v302 = vadd.f32 %v128, %v301
      %v303 = vpop.f32.mrb[0].mxu0
      %304 = vmatprep.mubr.f32.mxu0 0.0
      %305 = vmatmul.mubr.f32.gmra.mrb[0].mxu0 %v97
      %v306 = vpop.f32.mrb[0].mxu0
      %v307 = vadd.f32 %v128, %v306
      %v308 = vpop.f32.mrb[0].mxu0
      %309 = vmatprep.mubr.f32.mxu0 0.0
      %310 = vmatmul.mubr.f32.gmra.mrb[0].mxu0 %v98
      %v311 = vpop.f32.mrb[0].mxu0
      %v312 = vadd.f32 %v128, %v311
      %v313 = vpop.f32.mrb[0].mxu0
      %314 = vmatprep.mubr.f32.mxu0 0.0
      %315 = vmatmul.mubr.f32.gmra.mrb[0].mxu0 %v99
      %v316 = vpop.f32.mrb[0].mxu0
      %v317 = vadd.f32 %v128, %v316
      %v318 = vpop.f32.mrb[0].mxu0
      %319 = vmatprep.mubr.f32.mxu0 0.0
      %320 = vmatmul.mubr.f32.gmra.mrb[0].mxu0 %v100
      %v321 = vpop.f32.mrb[0].mxu0
      %v322 = vadd.f32 %v128, %v321
      %v323 = vpop.f32.mrb[0].mxu0
      %324 = vmatprep.mubr.f32.mxu0 0.0
      %325 = vmatmul.mubr.f32.gmra.mrb[0].mxu0 %v101
      %v326 = vpop.f32.mrb[0].mxu0
      %v327 = vadd.f32 %v128, %v326
      %v328 = vpop.f32.mrb[0].mxu0
      %329 = vmatprep.mubr.f32.mxu0 0.0
      %330 = vmatmul.mubr.f32.gmra.mrb[0].mxu0 %v102
      %v331 = vpop.f32.mrb[0].mxu0
      %v332 = vadd.f32 %v128, %v331
      %v333 = vpop.f32.mrb[0].mxu0
      %334 = vmatprep.mubr.f32.mxu0 0.0
      %335 = vmatmul.mubr.f32.gmra.mrb[0].mxu0 %v103
      %v336 = vpop.f32.mrb[0].mxu0
      %v337 = vadd.f32 %v128, %v336
      %v338 = vpop.f32.mrb[0].mxu0
      %339 = vmatprep.mubr.f32.mxu0 0.0
      %340 = vmatmul.mubr.f32.gmra.mrb[0].mxu0 %v104
      %v341 = vpop.f32.mrb[0].mxu0
      %v342 = vadd.f32 %v128, %v341
      %v343 = vpop.f32.mrb[0].mxu0
      %344 = vmatprep.mubr.f32.mxu0 0.0
      %345 = vmatmul.mubr.f32.gmra.mrb[0].mxu0 %v105
      %v346 = vpop.f32.mrb[0].mxu0
      %v347 = vadd.f32 %v128, %v346
      %v348 = vpop.f32.mrb[0].mxu0
      %349 = vmatprep.mubr.f32.mxu0 0.0
      %350 = vmatmul.mubr.f32.gmra.mrb[0].mxu0 %v106
      %v351 = vpop.f32.mrb[0].mxu0
      %v352 = vadd.f32 %v128, %v351
      %v353 = vpop.f32.mrb[0].mxu0
      %354 = vdwg.mxu0
      %v355 = vmax.f32 %v197, 0.0
      %v356 = vmax.f32 %v202, 0.0
      %v357 = vmax.f32 %v207, 0.0
      %v358 = vmax.f32 %v212, 0.0
      %v359 = vmax.f32 %v217, 0.0
      %v360 = vmax.f32 %v222, 0.0
      %v361 = vmax.f32 %v227, 0.0
      %v362 = vmax.f32 %v232, 0.0
      %v363 = vmax.f32 %v237, 0.0
      %v364 = vmax.f32 %v242, 0.0
      %v365 = vmax.f32 %v247, 0.0
      %v366 = vmax.f32 %v252, 0.0
      %v367 = vmax.f32 %v257, 0.0
      %v368 = vmax.f32 %v262, 0.0
      %v369 = vmax.f32 %v267, 0.0
      %v370 = vmax.f32 %v272, 0.0
      %v371 = vmax.f32 %v277, 0.0
      %v372 = vmax.f32 %v282, 0.0
      %v373 = vmax.f32 %v287, 0.0
      %v374 = vmax.f32 %v292, 0.0
      %v375 = vmax.f32 %v297, 0.0
      %v376 = vmax.f32 %v302, 0.0
      %v377 = vmax.f32 %v307, 0.0
      %v378 = vmax.f32 %v312, 0.0
      %v379 = vmax.f32 %v317, 0.0
      %v380 = vmax.f32 %v322, 0.0
      %v381 = vmax.f32 %v327, 0.0
      %v382 = vmax.f32 %v332, 0.0
      %v383 = vmax.f32 %v337, 0.0
      %v384 = vmax.f32 %v342, 0.0
      %v385 = vmax.f32 %v347, 0.0
      %v386 = vmax.f32 %v352, 0.0
      %387 = vst [vmem:[#allocation2] sm:$0xff] %v355
      %388 = vst [vmem:[#allocation2 + $0x8] sm:$0xff] %v356
      %389 = vst [vmem:[#allocation2 + $0x10] sm:$0xff] %v357
      %390 = vst [vmem:[#allocation2 + $0x18] sm:$0xff] %v358
      %391 = vst [vmem:[#allocation2 + $0x20] sm:$0xff] %v359
      %392 = vst [vmem:[#allocation2 + $0x28] sm:$0xff] %v360
      %393 = vst [vmem:[#allocation2 + $0x30] sm:$0xff] %v361
      %394 = vst [vmem:[#allocation2 + $0x38] sm:$0xff] %v362
      %395 = vst [vmem:[#allocation2 + $0x40] sm:$0xff] %v363
      %396 = vst [vmem:[#allocation2 + $0x48] sm:$0xff] %v364
      %397 = vst [vmem:[#allocation2 + $0x50] sm:$0xff] %v365
      %398 = vst [vmem:[#allocation2 + $0x58] sm:$0xff] %v366
      %399 = vst [vmem:[#allocation2 + $0x60] sm:$0xff] %v367
      %400 = vst [vmem:[#allocation2 + $0x68] sm:$0xff] %v368
      %401 = vst [vmem:[#allocation2 + $0x70] sm:$0xff] %v369
      %402 = vst [vmem:[#allocation2 + $0x78] sm:$0xff] %v370
      %403 = vst [vmem:[#allocation2 + $0x80] sm:$0xff] %v371
      %404 = vst [vmem:[#allocation2 + $0x88] sm:$0xff] %v372
      %405 = vst [vmem:[#allocation2 + $0x90] sm:$0xff] %v373
      %406 = vst [vmem:[#allocation2 + $0x98] sm:$0xff] %v374
      %407 = vst [vmem:[#allocation2 + $0xa0] sm:$0xff] %v375
      %408 = vst [vmem:[#allocation2 + $0xa8] sm:$0xff] %v376
      %409 = vst [vmem:[#allocation2 + $0xb0] sm:$0xff] %v377
      %410 = vst [vmem:[#allocation2 + $0xb8] sm:$0xff] %v378
      %411 = vst [vmem:[#allocation2 + $0xc0] sm:$0xff] %v379
      %412 = vst [vmem:[#allocation2 + $0xc8] sm:$0xff] %v380
      %413 = vst [vmem:[#allocation2 + $0xd0] sm:$0xff] %v381
      %414 = vst [vmem:[#allocation2 + $0xd8] sm:$0xff] %v382
      %415 = vst [vmem:[#allocation2 + $0xe0] sm:$0xff] %v383
      %416 = vst [vmem:[#allocation2 + $0xe8] sm:$0xff] %v384
      %417 = vst [vmem:[#allocation2 + $0xf0] sm:$0xff] %v385
      %418 = vst [vmem:[#allocation2 + $0xf8] sm:$0xff] %v386
    $region49: #{tpu_custom_call.1} parent=1 // pred_fallthru
      _
    %v419 = vld [vmem:[%s1] sm:$0xff]
    %v420 = vld [vmem:[%s1 + $0x8] sm:$0xff]
    %v421 = vld [vmem:[%s1 + $0x10] sm:$0xff]
    %v422 = vld [vmem:[%s1 + $0x18] sm:$0xff]
    %v423 = vld [vmem:[#allocation8] sm:$0xff]
    %v424 = vld [vmem:[#allocation8 + $0x8] sm:$0xff]
    %v425 = vld [vmem:[#allocation8 + $0x10] sm:$0xff]
    %v426 = vld [vmem:[#allocation8 + $0x18] sm:$0xff]
    %v427 = vld [vmem:[#allocation8 + $0x20] sm:$0xff]
    %v428 = vld [vmem:[#allocation8 + $0x28] sm:$0xff]
    %v429 = vld [vmem:[#allocation8 + $0x30] sm:$0xff]
    %v430 = vld [vmem:[#allocation8 + $0x38] sm:$0xff]
    %v431 = vld [vmem:[#allocation8 + $0x40] sm:$0xff]
    %v432 = vld [vmem:[#allocation8 + $0x48] sm:$0xff]
    %v433 = vld [vmem:[#allocation8 + $0x50] sm:$0xff]
    %v434 = vld [vmem:[#allocation8 + $0x58] sm:$0xff]
    %v435 = vld [vmem:[#allocation8 + $0x60] sm:$0xff]
    %v436 = vld [vmem:[#allocation8 + $0x68] sm:$0xff]
    %v437 = vld [vmem:[#allocation8 + $0x70] sm:$0xff]
    %v438 = vld [vmem:[#allocation8 + $0x78] sm:$0xff]
    %v439 = vld [vmem:[%s7] sm:$0x1]
    %v441 = vlaneseq
    %v442 = vshrl.u32 %v441, 7
    %v443 = vsub.s32 0, %v442
    %v444 = vrot.slane %v439, %v443
    %446 = vmatprep.subr.mxu0 0.0
    %447 = vmatpush1.msra.mxu0 %v423
    %448 = vmatprep.subr.mxu0 0.0
    %449 = vmatpush1.msra.mxu0 %v424
    %450 = vmatprep.subr.mxu0 0.0
    %451 = vmatpush1.msra.mxu0 %v425
    %452 = vmatprep.subr.mxu0 0.0
    %453 = vmatpush1.msra.mxu0 %v426
    %454 = vmatprep.subr.mxu0 0.0
    %455 = vmatpush1.msra.mxu0 %v427
    %456 = vmatprep.subr.mxu0 0.0
    %457 = vmatpush1.msra.mxu0 %v428
    %458 = vmatprep.subr.mxu0 0.0
    %459 = vmatpush1.msra.mxu0 %v429
    %460 = vmatprep.subr.mxu0 0.0
    %461 = vmatpush1.msra.mxu0 %v430
    %462 = vmatprep.subr.mxu0 0.0
    %463 = vmatpush1.msra.mxu0 %v431
    %464 = vmatprep.subr.mxu0 0.0
    %465 = vmatpush1.msra.mxu0 %v432
    %466 = vmatprep.subr.mxu0 0.0
    %467 = vmatpush1.msra.mxu0 %v433
    %468 = vmatprep.subr.mxu0 0.0
    %469 = vmatpush1.msra.mxu0 %v434
    %470 = vmatprep.subr.mxu0 0.0
    %471 = vmatpush1.msra.mxu0 %v435
    %472 = vmatprep.subr.mxu0 0.0
    %473 = vmatpush1.msra.mxu0 %v436
    %474 = vmatprep.subr.mxu0 0.0
    %475 = vmatpush1.msra.mxu0 %v437
    %476 = vmatprep.subr.mxu0 0.0
    %477 = vmatpush1.msra.mxu0 %v438
    %478 = vmatprep.subr.mxu0 0.0
    %479 = vmatpush1.msra.mxu0 0.0
    %480 = vmatprep.subr.mxu0 0.0
    %481 = vmatpush1.msra.mxu0 0.0
    %482 = vmatprep.subr.mxu0 0.0
    %483 = vmatpush1.msra.mxu0 0.0
    %484 = vmatprep.subr.mxu0 0.0
    %485 = vmatpush1.msra.mxu0 0.0
    %486 = vmatprep.subr.mxu0 0.0
    %487 = vmatpush1.msra.mxu0 0.0
    %488 = vmatprep.subr.mxu0 0.0
    %489 = vmatpush1.msra.mxu0 0.0
    %490 = vmatprep.subr.mxu0 0.0
    %491 = vmatpush1.msra.mxu0 0.0
    %492 = vmatprep.subr.mxu0 0.0
    %493 = vmatpush1.msra.mxu0 0.0
    %494 = vmatprep.subr.mxu0 0.0
    %495 = vmatpush1.msra.mxu0 0.0
    %496 = vmatprep.subr.mxu0 0.0
    %497 = vmatpush1.msra.mxu0 0.0
    %498 = vmatprep.subr.mxu0 0.0
    %499 = vmatpush1.msra.mxu0 0.0
    %500 = vmatprep.subr.mxu0 0.0
    %501 = vmatpush1.msra.mxu0 0.0
    %502 = vmatprep.subr.mxu0 0.0
    %503 = vmatpush1.msra.mxu0 0.0
    %504 = vmatprep.subr.mxu0 0.0
    %505 = vmatpush1.msra.mxu0 0.0
    %506 = vmatprep.subr.mxu0 0.0
    %507 = vmatpush1.msra.mxu0 0.0
    %508 = vmatprep.subr.mxu0 0.0
    %509 = vmatpush1.msra.mxu0 0.0
    %510 = vmatprep.mubr.f32.mxu0 0.0
    %511 = vmatmul.mubr.f32.gmra.mrb[0].mxu0 %v419
    %v512 = vpop.f32.mrb[0].mxu0
    %v513 = vadd.f32 %v444, %v512
    %v514 = vpop.f32.mrb[0].mxu0
    %515 = vmatprep.mubr.f32.mxu0 0.0
    %516 = vmatmul.mubr.f32.gmra.mrb[0].mxu0 %v420
    %v517 = vpop.f32.mrb[0].mxu0
    %v518 = vadd.f32 %v444, %v517
    %v519 = vpop.f32.mrb[0].mxu0
    %520 = vmatprep.mubr.f32.mxu0 0.0
    %521 = vmatmul.mubr.f32.gmra.mrb[0].mxu0 %v421
    %v522 = vpop.f32.mrb[0].mxu0
    %v523 = vadd.f32 %v444, %v522
    %v524 = vpop.f32.mrb[0].mxu0
    %525 = vmatprep.mubr.f32.mxu0 0.0
    %526 = vmatmul.mubr.f32.gmra.mrb[0].mxu0 %v422
    %v527 = vpop.f32.mrb[0].mxu0
    %v528 = vadd.f32 %v444, %v527
    %v529 = vpop.f32.mrb[0].mxu0
    %530 = vdwg.mxu0
    %v531 = vmax.f32 %v513, 0.0
    %v532 = vmax.f32 %v518, 0.0
    %v533 = vmax.f32 %v523, 0.0
    %v534 = vmax.f32 %v528, 0.0
    %v535 = vld [vmem:[#allocation2] sm:$0xff]
    %v536 = vld [vmem:[#allocation2 + $0x8] sm:$0xff]
    %v537 = vld [vmem:[#allocation2 + $0x10] sm:$0xff]
    %v538 = vld [vmem:[#allocation2 + $0x18] sm:$0xff]
    %v539 = vld [vmem:[#allocation2 + $0x20] sm:$0xff]
    %v540 = vld [vmem:[#allocation2 + $0x28] sm:$0xff]
    %v541 = vld [vmem:[#allocation2 + $0x30] sm:$0xff]
    %v542 = vld [vmem:[#allocation2 + $0x38] sm:$0xff]
    %v543 = vld [vmem:[#allocation2 + $0x40] sm:$0xff]
    %v544 = vld [vmem:[#allocation2 + $0x48] sm:$0xff]
    %v545 = vld [vmem:[#allocation2 + $0x50] sm:$0xff]
    %v546 = vld [vmem:[#allocation2 + $0x58] sm:$0xff]
    %v547 = vld [vmem:[#allocation2 + $0x60] sm:$0xff]
    %v548 = vld [vmem:[#allocation2 + $0x68] sm:$0xff]
    %v549 = vld [vmem:[#allocation2 + $0x70] sm:$0xff]
    %v550 = vld [vmem:[#allocation2 + $0x78] sm:$0xff]
    %v551 = vld [vmem:[#allocation2 + $0x80] sm:$0xff]
    %v552 = vld [vmem:[#allocation2 + $0x88] sm:$0xff]
    %v553 = vld [vmem:[#allocation2 + $0x90] sm:$0xff]
    %v554 = vld [vmem:[#allocation2 + $0x98] sm:$0xff]
    %v555 = vld [vmem:[#allocation2 + $0xa0] sm:$0xff]
    %v556 = vld [vmem:[#allocation2 + $0xa8] sm:$0xff]
    %v557 = vld [vmem:[#allocation2 + $0xb0] sm:$0xff]
    %v558 = vld [vmem:[#allocation2 + $0xb8] sm:$0xff]
    %v559 = vld [vmem:[#allocation2 + $0xc0] sm:$0xff]
    %v560 = vld [vmem:[#allocation2 + $0xc8] sm:$0xff]
    %v561 = vld [vmem:[#allocation2 + $0xd0] sm:$0xff]
    %v562 = vld [vmem:[#allocation2 + $0xd8] sm:$0xff]
    %v563 = vld [vmem:[#allocation2 + $0xe0] sm:$0xff]
    %v564 = vld [vmem:[#allocation2 + $0xe8] sm:$0xff]
    %v565 = vld [vmem:[#allocation2 + $0xf0] sm:$0xff]
    %v566 = vld [vmem:[#allocation2 + $0xf8] sm:$0xff]
    %567 = vmatprep.subr.mxu0 0.0
    %568 = vmatpush1.xpose.msra.mxu0 %v535
    %569 = vmatprep.subr.mxu0 0.0
    %570 = vmatpush1.xpose.msra.mxu0 %v536
    %571 = vmatprep.subr.mxu0 0.0
    %572 = vmatpush1.xpose.msra.mxu0 %v537
    %573 = vmatprep.subr.mxu0 0.0
    %574 = vmatpush1.xpose.msra.mxu0 %v538
    %575 = vmatprep.subr.mxu0 0.0
    %576 = vmatpush1.xpose.msra.mxu0 %v539
    %577 = vmatprep.subr.mxu0 0.0
    %578 = vmatpush1.xpose.msra.mxu0 %v540
    %579 = vmatprep.subr.mxu0 0.0
    %580 = vmatpush1.xpose.msra.mxu0 %v541
    %581 = vmatprep.subr.mxu0 0.0
    %582 = vmatpush1.xpose.msra.mxu0 %v542
    %583 = vmatprep.subr.mxu0 0.0
    %584 = vmatpush1.xpose.msra.mxu0 %v543
    %585 = vmatprep.subr.mxu0 0.0
    %586 = vmatpush1.xpose.msra.mxu0 %v544
    %587 = vmatprep.subr.mxu0 0.0
    %588 = vmatpush1.xpose.msra.mxu0 %v545
    %589 = vmatprep.subr.mxu0 0.0
    %590 = vmatpush1.xpose.msra.mxu0 %v546
    %591 = vmatprep.subr.mxu0 0.0
    %592 = vmatpush1.xpose.msra.mxu0 %v547
    %593 = vmatprep.subr.mxu0 0.0
    %594 = vmatpush1.xpose.msra.mxu0 %v548
    %595 = vmatprep.subr.mxu0 0.0
    %596 = vmatpush1.xpose.msra.mxu0 %v549
    %597 = vmatprep.subr.mxu0 0.0
    %598 = vmatpush1.xpose.msra.mxu0 %v550
    %599 = vmatprep.subr.mxu0 0.0
    %600 = vmatpush1.xpose.msra.mxu0 0.0
    %601 = vmatprep.subr.mxu0 0.0
    %602 = vmatpush1.xpose.msra.mxu0 0.0
    %603 = vmatprep.subr.mxu0 0.0
    %604 = vmatpush1.xpose.msra.mxu0 0.0
    %605 = vmatprep.subr.mxu0 0.0
    %606 = vmatpush1.xpose.msra.mxu0 0.0
    %607 = vmatprep.subr.mxu0 0.0
    %608 = vmatpush1.xpose.msra.mxu0 0.0
    %609 = vmatprep.subr.mxu0 0.0
    %610 = vmatpush1.xpose.msra.mxu0 0.0
    %611 = vmatprep.subr.mxu0 0.0
    %612 = vmatpush1.xpose.msra.mxu0 0.0
    %613 = vmatprep.subr.mxu0 0.0
    %614 = vmatpush1.xpose.msra.mxu0 0.0
    %615 = vmatprep.subr.mxu0 0.0
    %616 = vmatpush1.xpose.msra.mxu0 0.0
    %617 = vmatprep.subr.mxu0 0.0
    %618 = vmatpush1.xpose.msra.mxu0 0.0
    %619 = vmatprep.subr.mxu0 0.0
    %620 = vmatpush1.xpose.msra.mxu0 0.0
    %621 = vmatprep.subr.mxu0 0.0
    %622 = vmatpush1.xpose.msra.mxu0 0.0
    %623 = vmatprep.subr.mxu0 0.0
    %624 = vmatpush1.xpose.msra.mxu0 0.0
    %625 = vmatprep.subr.mxu0 0.0
    %626 = vmatpush1.xpose.msra.mxu0 0.0
    %627 = vmatprep.subr.mxu0 0.0
    %628 = vmatpush1.xpose.msra.mxu0 0.0
    %629 = vmatprep.subr.mxu0 0.0
    %630 = vmatpush1.xpose.msra.mxu0 0.0
    %631 = vmatprep.mubr.f32.mxu0 0.0
    %632 = vmatmul.mubr.f32.gmra.mrb[0].mxu0 %v531
    %v633 = vpop.f32.mrb[0].mxu0
    %v634 = vadd.f32 0.0, %v633
    %v635 = vpop.f32.mrb[0].mxu0
    %636 = vmatprep.mubr.f32.mxu0 0.0
    %637 = vmatmul.mubr.f32.gmra.mrb[0].mxu0 %v532
    %v638 = vpop.f32.mrb[0].mxu0
    %v639 = vadd.f32 0.0, %v638
    %v640 = vpop.f32.mrb[0].mxu0
    %641 = vdwg.mxu0
    %642 = vmatprep.subr.mxu0 0.0
    %643 = vmatpush1.xpose.msra.mxu0 %v551
    %644 = vmatprep.subr.mxu0 0.0
    %645 = vmatpush1.xpose.msra.mxu0 %v552
    %646 = vmatprep.subr.mxu0 0.0
    %647 = vmatpush1.xpose.msra.mxu0 %v553
    %648 = vmatprep.subr.mxu0 0.0
    %649 = vmatpush1.xpose.msra.mxu0 %v554
    %650 = vmatprep.subr.mxu0 0.0
    %651 = vmatpush1.xpose.msra.mxu0 %v555
    %652 = vmatprep.subr.mxu0 0.0
    %653 = vmatpush1.xpose.msra.mxu0 %v556
    %654 = vmatprep.subr.mxu0 0.0
    %655 = vmatpush1.xpose.msra.mxu0 %v557
    %656 = vmatprep.subr.mxu0 0.0
    %657 = vmatpush1.xpose.msra.mxu0 %v558
    %658 = vmatprep.subr.mxu0 0.0
    %659 = vmatpush1.xpose.msra.mxu0 %v559
    %660 = vmatprep.subr.mxu0 0.0
    %661 = vmatpush1.xpose.msra.mxu0 %v560
    %662 = vmatprep.subr.mxu0 0.0
    %663 = vmatpush1.xpose.msra.mxu0 %v561
    %664 = vmatprep.subr.mxu0 0.0
    %665 = vmatpush1.xpose.msra.mxu0 %v562
    %666 = vmatprep.subr.mxu0 0.0
    %667 = vmatpush1.xpose.msra.mxu0 %v563
    %668 = vmatprep.subr.mxu0 0.0
    %669 = vmatpush1.xpose.msra.mxu0 %v564
    %670 = vmatprep.subr.mxu0 0.0
    %671 = vmatpush1.xpose.msra.mxu0 %v565
    %672 = vmatprep.subr.mxu0 0.0
    %673 = vmatpush1.xpose.msra.mxu0 %v566
    %674 = vmatprep.subr.mxu0 0.0
    %675 = vmatpush1.xpose.msra.mxu0 0.0
    %676 = vmatprep.subr.mxu0 0.0
    %677 = vmatpush1.xpose.msra.mxu0 0.0
    %678 = vmatprep.subr.mxu0 0.0
    %679 = vmatpush1.xpose.msra.mxu0 0.0
    %680 = vmatprep.subr.mxu0 0.0
    %681 = vmatpush1.xpose.msra.mxu0 0.0
    %682 = vmatprep.subr.mxu0 0.0
    %683 = vmatpush1.xpose.msra.mxu0 0.0
    %684 = vmatprep.subr.mxu0 0.0
    %685 = vmatpush1.xpose.msra.mxu0 0.0
    %686 = vmatprep.subr.mxu0 0.0
    %687 = vmatpush1.xpose.msra.mxu0 0.0
    %688 = vmatprep.subr.mxu0 0.0
    %689 = vmatpush1.xpose.msra.mxu0 0.0
    %690 = vmatprep.subr.mxu0 0.0
    %691 = vmatpush1.xpose.msra.mxu0 0.0
    %692 = vmatprep.subr.mxu0 0.0
    %693 = vmatpush1.xpose.msra.mxu0 0.0
    %694 = vmatprep.subr.mxu0 0.0
    %695 = vmatpush1.xpose.msra.mxu0 0.0
    %696 = vmatprep.subr.mxu0 0.0
    %697 = vmatpush1.xpose.msra.mxu0 0.0
    %698 = vmatprep.subr.mxu0 0.0
    %699 = vmatpush1.xpose.msra.mxu0 0.0
    %700 = vmatprep.subr.mxu0 0.0
    %701 = vmatpush1.xpose.msra.mxu0 0.0
    %702 = vmatprep.subr.mxu0 0.0
    %703 = vmatpush1.xpose.msra.mxu0 0.0
    %704 = vmatprep.subr.mxu0 0.0
    %705 = vmatpush1.xpose.msra.mxu0 0.0
    %706 = vmatprep.mubr.f32.mxu0 0.0
    %707 = vmatmul.mubr.f32.gmra.mrb[0].mxu0 %v533
    %v708 = vpop.f32.mrb[0].mxu0
    %v709 = vadd.f32 0.0, %v708
    %v710 = vpop.f32.mrb[0].mxu0
    %711 = vmatprep.mubr.f32.mxu0 0.0
    %712 = vmatmul.mubr.f32.gmra.mrb[0].mxu0 %v534
    %v713 = vpop.f32.mrb[0].mxu0
    %v714 = vadd.f32 0.0, %v713
    %v715 = vpop.f32.mrb[0].mxu0
    %716 = vdwg.mxu0
    %v717 = vsub.f32 0.0, %v634
    %v718 = vsub.f32 0.0, %v639
    %v719 = vsub.f32 0.0, %v709
    %v720 = vsub.f32 0.0, %v714
    %v721 = vmul.f32 %v717, 1.442695
    %v722 = vpow.pop %v721
    %v723 = vmul.f32 %v718, 1.442695
    %v724 = vpow.pop %v723
    %v725 = vmul.f32 %v719, 1.442695
    %v726 = vpow.pop %v725
    %v727 = vmul.f32 %v720, 1.442695
    %v728 = vpow.pop %v727
    %v729 = vadd.f32 %v722, 1.0
    %v730 = vadd.f32 %v724, 1.0
    %v731 = vadd.f32 %v726, 1.0
    %v732 = vadd.f32 %v728, 1.0
    %v733 = vrcp.pop %v729
    %v734 = vrcp.pop %v730
    %v735 = vrcp.pop %v731
    %v736 = vrcp.pop %v732
    %v737 = vld [vmem:[%s3] sm:$0xff]
    %v738 = vld [vmem:[%s3 + $0x8] sm:$0xff]
    %v739 = vld [vmem:[%s3 + $0x10] sm:$0xff]
    %v740 = vld [vmem:[%s3 + $0x18] sm:$0xff]
    %742 = vset.pattern.permute.xlu0 0
    %743 = vperm.xlu0 %742, %v737
    %v744 = vpop.permute.xlu0 %743
    %747 = vset.pattern.permute.xlu0 0
    %748 = vperm.xlu0 %747, %v738
    %v749 = vpop.permute.xlu0 %748
    %752 = vset.pattern.permute.xlu0 0
    %753 = vperm.xlu0 %752, %v739
    %v754 = vpop.permute.xlu0 %753
    %757 = vset.pattern.permute.xlu0 0
    %758 = vperm.xlu0 %757, %v740
    %v759 = vpop.permute.xlu0 %758
    %v761 = vmul.f32 %v733, %v744
    %v762 = vmul.f32 %v734, %v749
    %v763 = vmul.f32 %v735, %v754
    %v764 = vmul.f32 %v736, %v759
    %v765 = vld [vmem:[%s2] sm:$0x1]
    %v766 = vld [vmem:[%s2 + $0x1] sm:$0x1]
    %v769 = vlaneseq
    %v770 = vshrl.u32 %v769, 7
    %v771 = vsub.s32 0, %v770
    %v772 = vrot.slane %v765, %v771
    %v773 = vlaneseq
    %v774 = vshrl.u32 %v773, 7
    %v775 = vsub.s32 0, %v774
    %v776 = vrot.slane %v766, %v775
    %v779 = vmul.f32 %v761, %v772
    %v780 = vmul.f32 %v762, %v772
    %v781 = vmul.f32 %v763, %v776
    %v782 = vmul.f32 %v764, %v776
    %783 = vst [vmem:[#allocation9] sm:$0xff] %v779
    %784 = vst [vmem:[#allocation9 + $0x8] sm:$0xff] %v780
    %785 = vst [vmem:[#allocation9 + $0x10] sm:$0xff] %v781
    %786 = vst [vmem:[#allocation9 + $0x18] sm:$0xff] %v782
    // Predicated region
    $region50: #{tpu_custom_call.1} parent=1 // pred_check
      _
    $region51: #{tpu_custom_call.1} parent=1 // pred_check_branch
      %788 = sbr.rel (0) target = $region53
    $region52: #{tpu_custom_call.1} parent=1 // pred_region
      %s790 = ssub.s32 512, 512
      %791 = vsyncadd [#allocation5], %s790
      %s792 = sshll.u32 [#allocation9], 4
      %s793 = int_to_ptr.vmem [resolvable:$true] %s792
      %798 = dma.vmem_to_hbm [thread:$0]  %s793, 512, %s8, [#allocation5], 128, 128, 8
    $region53: #{tpu_custom_call.1} parent=1 // pred_fallthru
      _
    // Predicated region
    $region54: #{tpu_custom_call.1} parent=1 // pred_check
      _
    $region55: #{tpu_custom_call.1} parent=1 // pred_check_branch
      %800 = sbr.rel (0) target = $region57
    $region56: #{tpu_custom_call.1} parent=1 // pred_region
      %801 = dma.done [#allocation5], 512
    $region57: #{tpu_custom_call.1} parent=1 // pred_fallthru
      _
    %802 = vsyncpa [#allocation4], 1
    %803 = vsyncpa [#allocation7], 1
    %804 = vsyncpa [#allocation5], 1

</llo_original>
